<compile_context>
chip_gen: v7x
topology: tpu7x:2x2x1
jax: 0.10.0
libtpu: 0.0.40
codegen_flags: <defaults>
</compile_context>

<pallas_src>
import functools
import math

import jax
import jax.numpy as jnp
from jax import lax
from jax.experimental import pallas as pl
from jax.experimental.pallas import tpu as pltpu

_MASK_VALUE = -1e30  # large finite negative: avoids exp(-inf - (-inf)) NaNs


def _flash_attention_kernel(xq_ref, xk_ref, wq_ref, wk_ref, wv_ref, wo_ref,
                            bo_ref, o_ref, q_sc, m_sc, l_sc, acc_sc, *, tq, tk):
    """Grid: (B, NQ, H, NK).

    Output block (b, qi) is resident across the (H, NK) reduction axes and is
    used directly as the out-projection accumulator; softmax state (m/l/acc)
    is resident across NK for the current head.
    """
    qi = pl.program_id(1)
    h = pl.program_id(2)
    ki = pl.program_id(3)
    nk = pl.num_programs(3)

    # ---- init the per-(b, q-tile) output accumulator once (bias folded in) ----
    @pl.when(jnp.logical_and(h == 0, ki == 0))
    def _():
        o_ref[0] = jnp.broadcast_to(bo_ref[...].astype(o_ref.dtype),
                                    o_ref.shape[1:])

    # ---- per (b, q-tile, head): project Q once, reset online-softmax state ----
    @pl.when(ki == 0)
    def _():
        q = jnp.dot(xq_ref[0], wq_ref[0], preferred_element_type=jnp.float32)
        q_sc[...] = q.astype(q_sc.dtype)           # bf16 operand for the MXU
        m_sc[...] = jnp.full(m_sc.shape, _MASK_VALUE, dtype=m_sc.dtype)
        l_sc[...] = jnp.zeros_like(l_sc)
        acc_sc[...] = jnp.zeros_like(acc_sc)

    # ---- causal block skip: KV tile entirely in the future of this Q tile ----
    @pl.when(ki * tk <= qi * tq + (tq - 1))
    def _():
        # Per-tile K/V projection for this head (kept fused; for very large
        # d_in a separate QKV-projection pass would avoid the recompute).
        xk = xk_ref[0]                                                   # (tk, d_in) bf16
        k = jnp.dot(xk, wk_ref[0], preferred_element_type=jnp.float32)   # (tk, hd)
        v = jnp.dot(xk, wv_ref[0], preferred_element_type=jnp.float32)   # (tk, hd)

        # scores = (q * scale) @ k^T ; scale already folded into W_query
        s = lax.dot_general(q_sc[...], k.astype(jnp.bfloat16),
                            (((1,), (1,)), ((), ())),
                            preferred_element_type=jnp.float32)          # (tq, tk)

        # causal mask (only diagonal-straddling blocks actually need it;
        # fully-future blocks were skipped above)
        row = qi * tq + lax.broadcasted_iota(jnp.int32, (tq, tk), 0)
        col = ki * tk + lax.broadcasted_iota(jnp.int32, (tq, tk), 1)
        s = jnp.where(col <= row, s, _MASK_VALUE)

        # online softmax update (f32)
        m_prev = m_sc[...]
        m_new = jnp.maximum(m_prev, jnp.max(s, axis=-1, keepdims=True))
        alpha = jnp.exp(m_prev - m_new)
        p = jnp.exp(s - m_new)
        l_sc[...] = alpha * l_sc[...] + jnp.sum(p, axis=-1, keepdims=True)
        acc_sc[...] = alpha * acc_sc[...] + jnp.dot(
            p.astype(jnp.bfloat16), v.astype(jnp.bfloat16),
            preferred_element_type=jnp.float32)
        m_sc[...] = m_new

    # ---- finalize this head: normalize, accumulate the output projection ----
    @pl.when(ki == nk - 1)
    def _():
        ctx = acc_sc[...] * pl.reciprocal(l_sc[...], approx=True)        # (tq, hd)
        o_ref[0] += jnp.dot(ctx.astype(jnp.bfloat16), wo_ref[0],
                            preferred_element_type=jnp.float32).astype(o_ref.dtype)

    # TODO(synk): dropout omitted (module default dropout=0.0 / eval semantics).


def attention_forward(x, wq, wk, wv, wo, bo, *, num_heads,
                      q_block=128, k_block=128):
    """x: (B, T, d_in); wq/wk/wv: (d_in, d_out); wo: (d_out, d_out); bo: (d_out,)."""
    B, T, d_in = x.shape
    d_out = wq.shape[1]
    assert d_out % num_heads == 0
    hd = d_out // num_heads

    tq = min(q_block, T)
    tk = min(k_block, T)
    assert T % tq == 0 and T % tk == 0, "T must be divisible by the q/k tiles"
    nq = T // tq
    nk = T // tk

    # Lane-dense output: pad d_out up to a multiple of 128 (zero-padded columns
    # stay exactly zero since the padded W_o columns / bias entries are zero).
    d_out_p = ((d_out + 127) // 128) * 128

    # Fold the 1/sqrt(head_dim) softmax scale into W_query at trace time and
    # split the weights per head so the kernel never slices along the lane axis.
    scale = 1.0 / math.sqrt(hd)
    wq_h = (wq * scale).reshape(d_in, num_heads, hd).transpose(1, 0, 2)  # (H, d_in, hd)
    wk_h = wk.reshape(d_in, num_heads, hd).transpose(1, 0, 2)
    wv_h = wv.reshape(d_in, num_heads, hd).transpose(1, 0, 2)
    wo_h = wo.reshape(num_heads, hd, d_out)                              # (H, hd, d_out)
    wo_h = jnp.pad(wo_h, ((0, 0), (0, 0), (0, d_out_p - d_out)))
    bo_p = jnp.pad(bo, (0, d_out_p - d_out)).reshape(1, d_out_p).astype(jnp.float32)

    # bf16 MXU operands (halves HBM/VMEM traffic); accumulation stays f32.
    xb = x.astype(jnp.bfloat16)
    wq_h = wq_h.astype(jnp.bfloat16)
    wk_h = wk_h.astype(jnp.bfloat16)
    wv_h = wv_h.astype(jnp.bfloat16)
    wo_h = wo_h.astype(jnp.bfloat16)

    kernel = functools.partial(_flash_attention_kernel, tq=tq, tk=tk)

    flops = int(2 * B * T * d_in * d_out * 3                 # QKV projections
                + 2 * B * num_heads * T * T * hd             # QK^T + PV (~causal)
                + 2 * B * T * d_out * d_out)                 # output projection
    cost = pl.CostEstimate(
        flops=flops,
        transcendentals=int(B * num_heads * T * T // 2),
        bytes_accessed=int(xb.size * 2 * 2
                           + (wq_h.size + wk_h.size + wv_h.size + wo_h.size) * 2
                           + B * T * d_out_p * 4))

    out_p = pl.pallas_call(
        kernel,
        out_shape=jax.ShapeDtypeStruct((B, T, d_out_p), jnp.float32),
        grid_spec=pltpu.PrefetchScalarGridSpec(
            num_scalar_prefetch=0,
            grid=(B, nq, num_heads, nk),
            in_specs=[
                pl.BlockSpec((1, tq, d_in), lambda b, qi, h, ki: (b, qi, 0)),    # x (query rows)
                pl.BlockSpec((1, tk, d_in), lambda b, qi, h, ki: (b, ki, 0)),    # x (key rows)
                pl.BlockSpec((1, d_in, hd), lambda b, qi, h, ki: (h, 0, 0)),     # W_query[h]
                pl.BlockSpec((1, d_in, hd), lambda b, qi, h, ki: (h, 0, 0)),     # W_key[h]
                pl.BlockSpec((1, d_in, hd), lambda b, qi, h, ki: (h, 0, 0)),     # W_value[h]
                pl.BlockSpec((1, hd, d_out_p), lambda b, qi, h, ki: (h, 0, 0)),  # W_out[h]
                pl.BlockSpec((1, d_out_p), lambda b, qi, h, ki: (0, 0)),         # out bias
            ],
            out_specs=pl.BlockSpec((1, tq, d_out_p),
                                   lambda b, qi, h, ki: (b, qi, 0)),
            scratch_shapes=[
                pltpu.VMEM((tq, hd), jnp.bfloat16),   # q tile for current head
                pltpu.VMEM((tq, 1), jnp.float32),     # m (running max)
                pltpu.VMEM((tq, 1), jnp.float32),     # l (running denominator)
                pltpu.VMEM((tq, hd), jnp.float32),    # softmax-weighted V accumulator
            ],
        ),
        compiler_params=pltpu.CompilerParams(
            dimension_semantics=("parallel", "parallel", "arbitrary", "arbitrary")),
        cost_estimate=cost,
    )(xb, xb, wq_h, wk_h, wv_h, wo_h, bo_p)

    return out_p[..., :d_out]


def _reference(x, wq, wk, wv, wo, bo, *, num_heads):
    B, T, d_in = x.shape
    d_out = wq.shape[1]
    hd = d_out // num_heads
    q = (x @ wq).reshape(B, T, num_heads, hd).transpose(0, 2, 1, 3)
    k = (x @ wk).reshape(B, T, num_heads, hd).transpose(0, 2, 1, 3)
    v = (x @ wv).reshape(B, T, num_heads, hd).transpose(0, 2, 1, 3)
    s = jnp.einsum("bhqd,bhkd->bhqk", q, k) / math.sqrt(hd)
    mask = jnp.triu(jnp.ones((T, T), dtype=bool), k=1)
    s = jnp.where(mask, -jnp.inf, s)
    w = jax.nn.softmax(s, axis=-1)
    ctx = jnp.einsum("bhqk,bhkd->bhqd", w, v).transpose(0, 2, 1, 3).reshape(B, T, d_out)
    return ctx @ wo + bo


if __name__ == "__main__":
    # Small shapes consistent with the module's forward: x is (b, num_tokens, d_in)
    B, T = 2, 8
    d_in, d_out = 32, 32
    num_heads = 4

    key = jax.random.PRNGKey(0)
    kx, kq, kk, kv, ko, kb = jax.random.split(key, 6)

    x = jax.random.normal(kx, (B, T, d_in), dtype=jnp.float32)
    # nn.Linear weights are (d_out, d_in); store the transpose (d_in, d_out) for x @ W
    wq = jax.random.normal(kq, (d_in, d_out), dtype=jnp.float32) * 0.1
    wk = jax.random.normal(kk, (d_in, d_out), dtype=jnp.float32) * 0.1
    wv = jax.random.normal(kv, (d_in, d_out), dtype=jnp.float32) * 0.1
    wo = jax.random.normal(ko, (d_out, d_out), dtype=jnp.float32) * 0.1
    bo = jax.random.normal(kb, (d_out,), dtype=jnp.float32) * 0.1

    out = attention_forward(x, wq, wk, wv, wo, bo, num_heads=num_heads)
    out = jax.block_until_ready(out)

    ref = _reference(x, wq, wk, wv, wo, bo, num_heads=num_heads)
    assert out.shape == (B, T, d_out)
    # bf16 MXU operands -> compare against the f32 reference with a bf16-level tolerance
    assert jnp.allclose(out, ref, atol=3e-2, rtol=3e-2), (
        f"mismatch vs reference, max abs err={float(jnp.max(jnp.abs(out - ref)))}")

    print("KERNEL_OK")
</pallas_src>

<mosaic_0001>
module attributes {stable_mosaic.version = 11 : i64} {
  func.func @_flash_attention_kernel(%arg0: i32, %arg1: i32, %arg2: i32, %arg3: i32, %arg4: memref<1x8x32xbf16, #tpu.memory_space<vmem>>, %arg5: memref<1x8x32xbf16, #tpu.memory_space<vmem>>, %arg6: memref<1x32x8xbf16, #tpu.memory_space<vmem>>, %arg7: memref<1x32x8xbf16, #tpu.memory_space<vmem>>, %arg8: memref<1x32x8xbf16, #tpu.memory_space<vmem>>, %arg9: memref<1x8x128xbf16, #tpu.memory_space<vmem>>, %arg10: memref<1x128xf32, #tpu.memory_space<vmem>>, %arg11: memref<1x8x128xf32, #tpu.memory_space<vmem>>, %arg12: memref<8x8xbf16, #tpu.memory_space<vmem>>, %arg13: memref<8x1xf32, #tpu.memory_space<vmem>>, %arg14: memref<8x1xf32, #tpu.memory_space<vmem>>, %arg15: memref<8x8xf32, #tpu.memory_space<vmem>>) attributes {dimension_semantics = [#tpu.dimension_semantics<parallel>, #tpu.dimension_semantics<parallel>, #tpu.dimension_semantics<arbitrary>, #tpu.dimension_semantics<arbitrary>], iteration_bounds = array<i64: 2, 1, 4, 1>, scalar_prefetch = 0 : i64, scratch_operands = 4 : i64, tpu.core_type = #tpu.core_type<tc>, window_params = [{transform_indices = @transform_0, window_bounds = array<i64: 1, 8, 32>}, {transform_indices = @transform_1, window_bounds = array<i64: 1, 8, 32>}, {transform_indices = @transform_2, window_bounds = array<i64: 1, 32, 8>}, {transform_indices = @transform_3, window_bounds = array<i64: 1, 32, 8>}, {transform_indices = @transform_4, window_bounds = array<i64: 1, 32, 8>}, {transform_indices = @transform_5, window_bounds = array<i64: 1, 8, 128>}, {pipeline_mode = #tpu.pipeline_mode<synchronous>, transform_indices = @transform_6, window_bounds = array<i64: 1, 128>}, {transform_indices = @transform_7, window_bounds = array<i64: 1, 8, 128>}]} {
    %c0_i32 = arith.constant 0 : i32
    %0 = arith.cmpi eq, %arg2, %c0_i32 : i32
    %c0_i32_0 = arith.constant 0 : i32
    %1 = arith.cmpi eq, %arg3, %c0_i32_0 : i32
    %2 = arith.andi %0, %1 : i1
    %3 = arith.extui %2 : i1 to i32
    %c0_i32_1 = arith.constant 0 : i32
    %4 = arith.cmpi ne, %3, %c0_i32_1 : i32
    scf.if %4 {
      %c0 = arith.constant 0 : index
      %c0_8 = arith.constant 0 : index
      %17 = vector.load %arg10[%c0, %c0_8] : memref<1x128xf32, #tpu.memory_space<vmem>>, vector<1x128xf32>
      %18 = vector.shape_cast %17 : vector<1x128xf32> to vector<1x128xf32>
      %19 = vector.broadcast %18 : vector<1x128xf32> to vector<8x128xf32>
      %c0_9 = arith.constant 0 : index
      %c0_10 = arith.constant 0 : index
      %c0_11 = arith.constant 0 : index
      %20 = vector.load %arg11[%c0_9, %c0_10, %c0_11] : memref<1x8x128xf32, #tpu.memory_space<vmem>>, vector<1x8x128xf32>
      %21 = vector.shape_cast %20 : vector<1x8x128xf32> to vector<8x128xf32>
      %22 = vector.shape_cast %19 : vector<8x128xf32> to vector<1x8x128xf32>
      tpu.vector_store %arg11[%c0_9, %c0_10, %c0_11], %22 {strides = array<i32>} : memref<1x8x128xf32, #tpu.memory_space<vmem>>, vector<1x8x128xf32>,
    } else {
    }
    %c0_i32_2 = arith.constant 0 : i32
    %5 = arith.cmpi eq, %arg3, %c0_i32_2 : i32
    %6 = arith.extui %5 : i1 to i32
    %c0_i32_3 = arith.constant 0 : i32
    %7 = arith.cmpi ne, %6, %c0_i32_3 : i32
    scf.if %7 {
      %c0 = arith.constant 0 : index
      %c0_8 = arith.constant 0 : index
      %c0_9 = arith.constant 0 : index
      %17 = vector.load %arg4[%c0, %c0_8, %c0_9] : memref<1x8x32xbf16, #tpu.memory_space<vmem>>, vector<1x8x32xbf16>
      %18 = vector.shape_cast %17 : vector<1x8x32xbf16> to vector<8x32xbf16>
      %c0_10 = arith.constant 0 : index
      %c0_11 = arith.constant 0 : index
      %c0_12 = arith.constant 0 : index
      %19 = vector.load %arg6[%c0_10, %c0_11, %c0_12] : memref<1x32x8xbf16, #tpu.memory_space<vmem>>, vector<1x32x8xbf16>
      %20 = vector.shape_cast %19 : vector<1x32x8xbf16> to vector<32x8xbf16>
      %cst = arith.constant dense<0.000000e+00> : vector<8x8xf32>
      %21 = tpu.matmul %18, %20, %cst {dimension_numbers = #tpu.dot_dimension_numbers<[1], [0], [0], [1], [0, 0, 1, 1], [], []>} : vector<8x32xbf16>, vector<32x8xbf16>, vector<8x8xf32> -> vector<8x8xf32>
      %22 = arith.truncf %21 : vector<8x8xf32> to vector<8x8xbf16>
      %c0_13 = arith.constant 0 : index
      %c0_14 = arith.constant 0 : index
      %23 = vector.load %arg12[%c0_13, %c0_14] : memref<8x8xbf16, #tpu.memory_space<vmem>>, vector<8x8xbf16>
      tpu.vector_store %arg12[%c0_13, %c0_14], %22 {strides = array<i32>} : memref<8x8xbf16, #tpu.memory_space<vmem>>, vector<8x8xbf16>,
      %cst_15 = arith.constant -1.000000e+30 : f32
      %24 = vector.broadcast %cst_15 : f32 to vector<8x1xf32>
      %c0_16 = arith.constant 0 : index
      %c0_17 = arith.constant 0 : index
      %25 = vector.load %arg13[%c0_16, %c0_17] : memref<8x1xf32, #tpu.memory_space<vmem>>, vector<8x1xf32>
      tpu.vector_store %arg13[%c0_16, %c0_17], %24 {strides = array<i32>} : memref<8x1xf32, #tpu.memory_space<vmem>>, vector<8x1xf32>,
      %cst_18 = arith.constant 0.000000e+00 : f32
      %26 = vector.broadcast %cst_18 : f32 to vector<8x1xf32>
      %c0_19 = arith.constant 0 : index
      %c0_20 = arith.constant 0 : index
      %27 = vector.load %arg14[%c0_19, %c0_20] : memref<8x1xf32, #tpu.memory_space<vmem>>, vector<8x1xf32>
      tpu.vector_store %arg14[%c0_19, %c0_20], %26 {strides = array<i32>} : memref<8x1xf32, #tpu.memory_space<vmem>>, vector<8x1xf32>,
      %cst_21 = arith.constant 0.000000e+00 : f32
      %28 = vector.broadcast %cst_21 : f32 to vector<8x8xf32>
      %c0_22 = arith.constant 0 : index
      %c0_23 = arith.constant 0 : index
      %29 = vector.load %arg15[%c0_22, %c0_23] : memref<8x8xf32, #tpu.memory_space<vmem>>, vector<8x8xf32>
      tpu.vector_store %arg15[%c0_22, %c0_23], %28 {strides = array<i32>} : memref<8x8xf32, #tpu.memory_space<vmem>>, vector<8x8xf32>,
    } else {
    }
    %c8_i32 = arith.constant 8 : i32
    %8 = arith.muli %arg3, %c8_i32 : i32
    %c8_i32_4 = arith.constant 8 : i32
    %9 = arith.muli %arg1, %c8_i32_4 : i32
    %c7_i32 = arith.constant 7 : i32
    %10 = arith.addi %9, %c7_i32 : i32
    %11 = arith.cmpi sle, %8, %10 : i32
    %12 = arith.extui %11 : i1 to i32
    %c0_i32_5 = arith.constant 0 : i32
    %13 = arith.cmpi ne, %12, %c0_i32_5 : i32
    scf.if %13 {
      %c0 = arith.constant 0 : index
      %c0_8 = arith.constant 0 : index
      %c0_9 = arith.constant 0 : index
      %17 = vector.load %arg5[%c0, %c0_8, %c0_9] : memref<1x8x32xbf16, #tpu.memory_space<vmem>>, vector<1x8x32xbf16>
      %18 = vector.shape_cast %17 : vector<1x8x32xbf16> to vector<8x32xbf16>
      %c0_10 = arith.constant 0 : index
      %c0_11 = arith.constant 0 : index
      %c0_12 = arith.constant 0 : index
      %19 = vector.load %arg7[%c0_10, %c0_11, %c0_12] : memref<1x32x8xbf16, #tpu.memory_space<vmem>>, vector<1x32x8xbf16>
      %20 = vector.shape_cast %19 : vector<1x32x8xbf16> to vector<32x8xbf16>
      %cst = arith.constant dense<0.000000e+00> : vector<8x8xf32>
      %21 = tpu.matmul %18, %20, %cst {dimension_numbers = #tpu.dot_dimension_numbers<[1], [0], [0], [1], [0, 0, 1, 1], [], []>} : vector<8x32xbf16>, vector<32x8xbf16>, vector<8x8xf32> -> vector<8x8xf32>
      %c0_13 = arith.constant 0 : index
      %c0_14 = arith.constant 0 : index
      %c0_15 = arith.constant 0 : index
      %22 = vector.load %arg8[%c0_13, %c0_14, %c0_15] : memref<1x32x8xbf16, #tpu.memory_space<vmem>>, vector<1x32x8xbf16>
      %23 = vector.shape_cast %22 : vector<1x32x8xbf16> to vector<32x8xbf16>
      %cst_16 = arith.constant dense<0.000000e+00> : vector<8x8xf32>
      %24 = tpu.matmul %18, %23, %cst_16 {dimension_numbers = #tpu.dot_dimension_numbers<[1], [0], [0], [1], [0, 0, 1, 1], [], []>} : vector<8x32xbf16>, vector<32x8xbf16>, vector<8x8xf32> -> vector<8x8xf32>
      %c0_17 = arith.constant 0 : index
      %c0_18 = arith.constant 0 : index
      %25 = vector.load %arg12[%c0_17, %c0_18] : memref<8x8xbf16, #tpu.memory_space<vmem>>, vector<8x8xbf16>
      %26 = arith.truncf %21 : vector<8x8xf32> to vector<8x8xbf16>
      %cst_19 = arith.constant dense<0.000000e+00> : vector<8x8xf32>
      %27 = tpu.matmul %25, %26, %cst_19 {dimension_numbers = #tpu.dot_dimension_numbers<[1], [1], [0], [0], [0, 0, 1, 0], [], []>} : vector<8x8xbf16>, vector<8x8xbf16>, vector<8x8xf32> -> vector<8x8xf32>
      %c8_i32_20 = arith.constant 8 : i32
      %28 = arith.muli %arg1, %c8_i32_20 : i32
      %29 = tpu.iota {dimensions = array<i32: 0>} : vector<8x8xi32>
      %30 = vector.broadcast %28 : i32 to vector<8x8xi32>
      %31 = arith.addi %30, %29 : vector<8x8xi32>
      %c8_i32_21 = arith.constant 8 : i32
      %32 = arith.muli %arg3, %c8_i32_21 : i32
      %33 = tpu.iota {dimensions = array<i32: 1>} : vector<8x8xi32>
      %34 = vector.broadcast %32 : i32 to vector<8x8xi32>
      %35 = arith.addi %34, %33 : vector<8x8xi32>
      %36 = arith.cmpi sle, %35, %31 : vector<8x8xi32>
      %cst_22 = arith.constant -1.000000e+30 : f32
      %37 = vector.broadcast %cst_22 : f32 to vector<8x8xf32>
      %38 = arith.select %36, %27, %37 : vector<8x8xi1>, vector<8x8xf32>
      %c0_23 = arith.constant 0 : index
      %c0_24 = arith.constant 0 : index
      %39 = vector.load %arg13[%c0_23, %c0_24] : memref<8x1xf32, #tpu.memory_space<vmem>>, vector<8x1xf32>
      %cst_25 = arith.constant dense<0xFF800000> : vector<8xf32>
      %40 = vector.multi_reduction <maximumf>, %38, %cst_25 [1] : vector<8x8xf32> to vector<8xf32>
      %41 = vector.shape_cast %40 : vector<8xf32> to vector<8x1xf32>
      %42 = arith.maximumf %39, %41 : vector<8x1xf32>
      %43 = arith.subf %39, %42 : vector<8x1xf32>
      %44 = math.exp %43 : vector<8x1xf32>
      %45 = vector.broadcast %42 : vector<8x1xf32> to vector<8x8xf32>
      %46 = arith.subf %38, %45 : vector<8x8xf32>
      %47 = math.exp %46 : vector<8x8xf32>
      %c0_26 = arith.constant 0 : index
      %c0_27 = arith.constant 0 : index
      %48 = vector.load %arg14[%c0_26, %c0_27] : memref<8x1xf32, #tpu.memory_space<vmem>>, vector<8x1xf32>
      %49 = arith.mulf %44, %48 : vector<8x1xf32>
      %cst_28 = arith.constant dense<0.000000e+00> : vector<8xf32>
      %50 = vector.multi_reduction <add>, %47, %cst_28 [1] : vector<8x8xf32> to vector<8xf32>
      %51 = vector.shape_cast %50 : vector<8xf32> to vector<8x1xf32>
      %52 = arith.addf %49, %51 : vector<8x1xf32>
      %c0_29 = arith.constant 0 : index
      %c0_30 = arith.constant 0 : index
      %53 = vector.load %arg14[%c0_29, %c0_30] : memref<8x1xf32, #tpu.memory_space<vmem>>, vector<8x1xf32>
      tpu.vector_store %arg14[%c0_29, %c0_30], %52 {strides = array<i32>} : memref<8x1xf32, #tpu.memory_space<vmem>>, vector<8x1xf32>,
      %c0_31 = arith.constant 0 : index
      %c0_32 = arith.constant 0 : index
      %54 = vector.load %arg15[%c0_31, %c0_32] : memref<8x8xf32, #tpu.memory_space<vmem>>, vector<8x8xf32>
      %55 = vector.broadcast %44 : vector<8x1xf32> to vector<8x8xf32>
      %56 = arith.mulf %55, %54 : vector<8x8xf32>
      %57 = arith.truncf %47 : vector<8x8xf32> to vector<8x8xbf16>
      %58 = arith.truncf %24 : vector<8x8xf32> to vector<8x8xbf16>
      %cst_33 = arith.constant dense<0.000000e+00> : vector<8x8xf32>
      %59 = tpu.matmul %57, %58, %cst_33 {dimension_numbers = #tpu.dot_dimension_numbers<[1], [0], [0], [1], [0, 0, 1, 1], [], []>} : vector<8x8xbf16>, vector<8x8xbf16>, vector<8x8xf32> -> vector<8x8xf32>
      %60 = arith.addf %56, %59 : vector<8x8xf32>
      %c0_34 = arith.constant 0 : index
      %c0_35 = arith.constant 0 : index
      %61 = vector.load %arg15[%c0_34, %c0_35] : memref<8x8xf32, #tpu.memory_space<vmem>>, vector<8x8xf32>
      tpu.vector_store %arg15[%c0_34, %c0_35], %60 {strides = array<i32>} : memref<8x8xf32, #tpu.memory_space<vmem>>, vector<8x8xf32>,
      %c0_36 = arith.constant 0 : index
      %c0_37 = arith.constant 0 : index
      %62 = vector.load %arg13[%c0_36, %c0_37] : memref<8x1xf32, #tpu.memory_space<vmem>>, vector<8x1xf32>
      tpu.vector_store %arg13[%c0_36, %c0_37], %42 {strides = array<i32>} : memref<8x1xf32, #tpu.memory_space<vmem>>, vector<8x1xf32>,
    } else {
    }
    %c0_i32_6 = arith.constant 0 : i32
    %14 = arith.cmpi eq, %arg3, %c0_i32_6 : i32
    %15 = arith.extui %14 : i1 to i32
    %c0_i32_7 = arith.constant 0 : i32
    %16 = arith.cmpi ne, %15, %c0_i32_7 : i32
    scf.if %16 {
      %c0 = arith.constant 0 : index
      %c0_8 = arith.constant 0 : index
      %17 = vector.load %arg15[%c0, %c0_8] : memref<8x8xf32, #tpu.memory_space<vmem>>, vector<8x8xf32>
      %c0_9 = arith.constant 0 : index
      %c0_10 = arith.constant 0 : index
      %18 = vector.load %arg14[%c0_9, %c0_10] : memref<8x1xf32, #tpu.memory_space<vmem>>, vector<8x1xf32>
      %19 = tpu.reciprocal %18 {approx = true} : vector<8x1xf32> -> vector<8x1xf32>
      %20 = vector.broadcast %19 : vector<8x1xf32> to vector<8x8xf32>
      %21 = arith.mulf %17, %20 : vector<8x8xf32>
      %c0_11 = arith.constant 0 : index
      %c0_12 = arith.constant 0 : index
      %c0_13 = arith.constant 0 : index
      %22 = vector.load %arg11[%c0_11, %c0_12, %c0_13] : memref<1x8x128xf32, #tpu.memory_space<vmem>>, vector<1x8x128xf32>
      %23 = vector.shape_cast %22 : vector<1x8x128xf32> to vector<8x128xf32>
      %24 = arith.truncf %21 : vector<8x8xf32> to vector<8x8xbf16>
      %c0_14 = arith.constant 0 : index
      %c0_15 = arith.constant 0 : index
      %c0_16 = arith.constant 0 : index
      %25 = vector.load %arg9[%c0_14, %c0_15, %c0_16] : memref<1x8x128xbf16, #tpu.memory_space<vmem>>, vector<1x8x128xbf16>
      %26 = vector.shape_cast %25 : vector<1x8x128xbf16> to vector<8x128xbf16>
      %cst = arith.constant dense<0.000000e+00> : vector<8x128xf32>
      %27 = tpu.matmul %24, %26, %cst {dimension_numbers = #tpu.dot_dimension_numbers<[1], [0], [0], [1], [0, 0, 1, 1], [], []>} : vector<8x8xbf16>, vector<8x128xbf16>, vector<8x128xf32> -> vector<8x128xf32>
      %28 = arith.addf %23, %27 : vector<8x128xf32>
      %c0_17 = arith.constant 0 : index
      %c0_18 = arith.constant 0 : index
      %c0_19 = arith.constant 0 : index
      %29 = vector.load %arg11[%c0_17, %c0_18, %c0_19] : memref<1x8x128xf32, #tpu.memory_space<vmem>>, vector<1x8x128xf32>
      %30 = vector.shape_cast %29 : vector<1x8x128xf32> to vector<8x128xf32>
      %31 = vector.shape_cast %28 : vector<8x128xf32> to vector<1x8x128xf32>
      tpu.vector_store %arg11[%c0_17, %c0_18, %c0_19], %31 {strides = array<i32>} : memref<1x8x128xf32, #tpu.memory_space<vmem>>, vector<1x8x128xf32>,
    } else {
    }
    return
  }
  func.func @transform_0(%arg0: i32, %arg1: i32, %arg2: i32, %arg3: i32) -> (i32, i32, i32) {
    %c0_i32 = arith.constant 0 : i32
    %c0_i32_0 = arith.constant 0 : i32
    return %arg0, %arg1, %c0_i32 : i32, i32, i32
  }
  func.func @transform_1(%arg0: i32, %arg1: i32, %arg2: i32, %arg3: i32) -> (i32, i32, i32) {
    %c0_i32 = arith.constant 0 : i32
    %c0_i32_0 = arith.constant 0 : i32
    return %arg0, %arg3, %c0_i32 : i32, i32, i32
  }
  func.func @transform_2(%arg0: i32, %arg1: i32, %arg2: i32, %arg3: i32) -> (i32, i32, i32) {
    %c0_i32 = arith.constant 0 : i32
    %c0_i32_0 = arith.constant 0 : i32
    %c0_i32_1 = arith.constant 0 : i32
    return %arg2, %c0_i32, %c0_i32_0 : i32, i32, i32
  }
  func.func @transform_3(%arg0: i32, %arg1: i32, %arg2: i32, %arg3: i32) -> (i32, i32, i32) {
    %c0_i32 = arith.constant 0 : i32
    %c0_i32_0 = arith.constant 0 : i32
    %c0_i32_1 = arith.constant 0 : i32
    return %arg2, %c0_i32, %c0_i32_0 : i32, i32, i32
  }
  func.func @transform_4(%arg0: i32, %arg1: i32, %arg2: i32, %arg3: i32) -> (i32, i32, i32) {
    %c0_i32 = arith.constant 0 : i32
    %c0_i32_0 = arith.constant 0 : i32
    %c0_i32_1 = arith.constant 0 : i32
    return %arg2, %c0_i32, %c0_i32_0 : i32, i32, i32
  }
  func.func @transform_5(%arg0: i32, %arg1: i32, %arg2: i32, %arg3: i32) -> (i32, i32, i32) {
    %c0_i32 = arith.constant 0 : i32
    %c0_i32_0 = arith.constant 0 : i32
    %c0_i32_1 = arith.constant 0 : i32
    return %arg2, %c0_i32, %c0_i32_0 : i32, i32, i32
  }
  func.func @transform_6(%arg0: i32, %arg1: i32, %arg2: i32, %arg3: i32) -> (i32, i32) {
    %c0_i32 = arith.constant 0 : i32
    %c0_i32_0 = arith.constant 0 : i32
    %c0_i32_1 = arith.constant 0 : i32
    return %c0_i32, %c0_i32_0 : i32, i32
  }
  func.func @transform_7(%arg0: i32, %arg1: i32, %arg2: i32, %arg3: i32) -> (i32, i32, i32) {
    %c0_i32 = arith.constant 0 : i32
    %c0_i32_0 = arith.constant 0 : i32
    return %arg0, %arg1, %c0_i32 : i32, i32, i32
  }
}

</mosaic_0001>

<llo_original>
// kernel: tpu_custom_call.1
$region0: #{tpu_custom_call.1}
  #allocation0 [shape = 'u32[]', space=smem, size = 0x4, offset = 0x4, fixed_abs, tag = 'smem constant byte address 0x4 - core index']
  #allocation1 [shape = 'u32[144,128]{1,0:T(1,128)}', space=vmem, size = 0x12000, scoped, tag = 'internal scratch']
  #allocation2 [shape = 'bf16[8,8]{1,0:T(8,128)(2,1)}', space=vmem, size = 0x800, scoped, tag = 'scratch operand']
  #allocation3 [shape = 'f32[8,1]{1,0:T(8,128)}', space=vmem, size = 0x1000, scoped, tag = 'scratch operand']
  #allocation4 [shape = 'f32[8,1]{1,0:T(8,128)}', space=vmem, size = 0x1000, scoped, tag = 'scratch operand']
  #allocation5 [shape = 'f32[8,8]{1,0:T(8,128)}', space=vmem, size = 0x1000, scoped, tag = 'scratch operand']
  %s0 = inlined_call_operand.vmem [shape: bf16[2,8,32], index: 0, kind: input, shape index: {}]
  %s1 = inlined_call_operand.vmem [shape: bf16[2,8,32], index: 1, kind: input, shape index: {}]
  %s2 = inlined_call_operand.vmem [shape: bf16[4,32,8], index: 2, kind: input, shape index: {}]
  %s3 = inlined_call_operand.vmem [shape: bf16[4,32,8], index: 3, kind: input, shape index: {}]
  %s4 = inlined_call_operand.vmem [shape: bf16[4,32,8], index: 4, kind: input, shape index: {}]
  %s5 = inlined_call_operand.vmem [shape: bf16[4,8,128], index: 5, kind: input, shape index: {}]
  %s6 = inlined_call_operand.vmem [shape: f32[1,128], index: 6, kind: input, shape index: {}]
  %s7 = inlined_call_operand.hbm [shape: f32[2,8,128], index: 7, kind: output, shape index: {}]
  %s8 = sld [smem:[#allocation0]]
  $region77: #{tpu_custom_call.1} parent=0
    _
  %s10 = ssub.s32 1, %s8
  %s11 = scalar_select 0, %s10, %s8
  $region1: #{tpu_custom_call.1} parent=0
    #allocation6 [shape = 'u8[8192]{0}', space=vmem, size = 0x2000, scoped, tag = 'output window, operand 0']
    #allocation7 [shape = 's32[2]{0}', space=sflag, size = 0x8, scoped, tag = 'scoped memory for tpu_custom_call.1']
    %12 = vsyncpa [#allocation7], 0
    %s13 = scalar_lea.sflag [#allocation7], 1
    %14 = vsyncpa %s13, 0
    loop: start=0, step=1, limit=10
    $region2: #{tpu_custom_call.1} parent=1 // loop_pre_header
      _
    $region3: #{tpu_custom_call.1} parent=1 // loop_header
      %s16 = sphi 0, %s20
      %p17 = scmp.ge.s32.totalorder %s16, 10
      %s23 = sphi 0, %s49
      %s24 = sphi 0, %s45
      %s25 = sphi 0, %s41
      %s26 = sphi 0, %s37
      %s27 = sphi 0, %s23
      %s28 = sphi 0, %s24
      %s29 = sphi 0, %s25
      %s30 = sphi 0, %s26
      %s31 = sphi 0, %s27
      %s32 = sphi 0, %s28
      %s33 = sphi 0, %s29
      %s34 = sphi 0, %s30
      %s54 = sphi 0, %s56
      %s57 = sphi 0, %s54
      %s58 = sphi 0, %s57
      %s74 = sphi 0, %s58
      %s82 = sphi 0, %s84
      %s85 = sphi 0, %s82
      %s86 = sphi 0, %s85
      %s102 = sphi 0, %s86
      %s108 = sphi 0, %s110
      %s111 = sphi 0, %s108
      %s112 = sphi 0, %s111
      %s128 = sphi 0, %s112
      %s134 = sphi 0, %s136
      %s137 = sphi 0, %s134
      %s138 = sphi 0, %s137
      %s154 = sphi 0, %s138
      %s160 = sphi 0, %s162
      %s163 = sphi 0, %s160
      %s164 = sphi 0, %s163
      %s180 = sphi 0, %s164
      %s186 = sphi 0, %s188
      %s189 = sphi 0, %s186
      %s190 = sphi 0, %s189
      %s206 = sphi 0, %s190
      %s210 = sphi 0, %s210
      %s212 = sphi 0, %s210
      %s213 = sphi 0, %s212
      %s227 = sphi 0, %s213
      %s235 = sphi 0, %s237
      %s238 = sphi 0, %s235
      %s239 = sphi 0, %s238
      %s255 = sphi 0, %s239
    $region4: #{tpu_custom_call.1} parent=1 // loop_header_branch
      %19 = sbr.rel (%p17) target = $region8
    $region5: #{tpu_custom_call.1} parent=1 // loop_body
      %s21 = ssub.s32 %s16, 1
      %s22 = ssub.s32 %s16, 2
      %s35 = sadd.s32 1, %s26
      %p36 = scmp.ge.s32.totalorder %s35, 1
      %s37 = scalar_select %p36, 0, %s35
      %s38 = sadd.s32 1, %s25
      %s39 = scalar_select %p36, %s38, %s25
      %p40 = scmp.ge.s32.totalorder %s39, 4
      %s41 = scalar_select %p40, 0, %s39
      %s42 = sadd.s32 1, %s24
      %s43 = scalar_select %p40, %s42, %s24
      %p44 = scmp.ge.s32.totalorder %s43, 1
      %s45 = scalar_select %p44, 0, %s43
      %s46 = sadd.s32 1, %s23
      %s47 = scalar_select %p44, %s46, %s23
      %p48 = scmp.ge.s32.totalorder %s47, 2
      %s49 = scalar_select %p48, 0, %s47
      %s50 = ssub.s32 %s23, %s49
      %s51 = ssub.s32 %s24, %s45
      %s52 = sor.u32 %s50, %s51
      %p53 = scmp.eq.s32.totalorder %s52, 0
      %s55 = sadd.s32 %s54, 1
      %s56 = scalar_select %p53, %s54, %s55
      %p59 = pneg %p53
      %p60 = scmp.eq.s32.totalorder %s16, 7
      %p61 = por %p59, %p60
      %p62 = scmp.ne.s32.totalorder %s54, %s57
      %p63 = scmp.eq.s32.totalorder %s16, 0
      %p64 = por %p62, %p63
      %p65 = scmp.ne.s32.totalorder %s54, %s57
      %p66 = scmp.eq.s32.totalorder %s21, 7
      %p67 = por %p65, %p66
      %p68 = scmp.ne.s32.totalorder %s57, %s58
      %p69 = scmp.eq.s32.totalorder %s21, 0
      %p70 = por %p68, %p69
      %p71 = scmp.ne.s32.totalorder %s57, %s58
      %p72 = scmp.eq.s32.totalorder %s22, 7
      %p73 = por %p71, %p72
      %p75 = scmp.ne.s32.totalorder %s58, %s74
      %p76 = scmp.eq.s32.totalorder %s22, 0
      %p77 = por %p75, %p76
      %s78 = ssub.s32 %s23, %s49
      %s79 = ssub.s32 %s26, %s37
      %s80 = sor.u32 %s78, %s79
      %p81 = scmp.eq.s32.totalorder %s80, 0
      %s83 = sadd.s32 %s82, 1
      %s84 = scalar_select %p81, %s82, %s83
      %p87 = pneg %p81
      %p88 = scmp.eq.s32.totalorder %s16, 7
      %p89 = por %p87, %p88
      %p90 = scmp.ne.s32.totalorder %s82, %s85
      %p91 = scmp.eq.s32.totalorder %s16, 0
      %p92 = por %p90, %p91
      %p93 = scmp.ne.s32.totalorder %s82, %s85
      %p94 = scmp.eq.s32.totalorder %s21, 7
      %p95 = por %p93, %p94
      %p96 = scmp.ne.s32.totalorder %s85, %s86
      %p97 = scmp.eq.s32.totalorder %s21, 0
      %p98 = por %p96, %p97
      %p99 = scmp.ne.s32.totalorder %s85, %s86
      %p100 = scmp.eq.s32.totalorder %s22, 7
      %p101 = por %p99, %p100
      %p103 = scmp.ne.s32.totalorder %s86, %s102
      %p104 = scmp.eq.s32.totalorder %s22, 0
      %p105 = por %p103, %p104
      %s106 = ssub.s32 %s25, %s41
      %p107 = scmp.eq.s32.totalorder %s106, 0
      %s109 = sadd.s32 %s108, 1
      %s110 = scalar_select %p107, %s108, %s109
      %p113 = pneg %p107
      %p114 = scmp.eq.s32.totalorder %s16, 7
      %p115 = por %p113, %p114
      %p116 = scmp.ne.s32.totalorder %s108, %s111
      %p117 = scmp.eq.s32.totalorder %s16, 0
      %p118 = por %p116, %p117
      %p119 = scmp.ne.s32.totalorder %s108, %s111
      %p120 = scmp.eq.s32.totalorder %s21, 7
      %p121 = por %p119, %p120
      %p122 = scmp.ne.s32.totalorder %s111, %s112
      %p123 = scmp.eq.s32.totalorder %s21, 0
      %p124 = por %p122, %p123
      %p125 = scmp.ne.s32.totalorder %s111, %s112
      %p126 = scmp.eq.s32.totalorder %s22, 7
      %p127 = por %p125, %p126
      %p129 = scmp.ne.s32.totalorder %s112, %s128
      %p130 = scmp.eq.s32.totalorder %s22, 0
      %p131 = por %p129, %p130
      %s132 = ssub.s32 %s25, %s41
      %p133 = scmp.eq.s32.totalorder %s132, 0
      %s135 = sadd.s32 %s134, 1
      %s136 = scalar_select %p133, %s134, %s135
      %p139 = pneg %p133
      %p140 = scmp.eq.s32.totalorder %s16, 7
      %p141 = por %p139, %p140
      %p142 = scmp.ne.s32.totalorder %s134, %s137
      %p143 = scmp.eq.s32.totalorder %s16, 0
      %p144 = por %p142, %p143
      %p145 = scmp.ne.s32.totalorder %s134, %s137
      %p146 = scmp.eq.s32.totalorder %s21, 7
      %p147 = por %p145, %p146
      %p148 = scmp.ne.s32.totalorder %s137, %s138
      %p149 = scmp.eq.s32.totalorder %s21, 0
      %p150 = por %p148, %p149
      %p151 = scmp.ne.s32.totalorder %s137, %s138
      %p152 = scmp.eq.s32.totalorder %s22, 7
      %p153 = por %p151, %p152
      %p155 = scmp.ne.s32.totalorder %s138, %s154
      %p156 = scmp.eq.s32.totalorder %s22, 0
      %p157 = por %p155, %p156
      %s158 = ssub.s32 %s25, %s41
      %p159 = scmp.eq.s32.totalorder %s158, 0
      %s161 = sadd.s32 %s160, 1
      %s162 = scalar_select %p159, %s160, %s161
      %p165 = pneg %p159
      %p166 = scmp.eq.s32.totalorder %s16, 7
      %p167 = por %p165, %p166
      %p168 = scmp.ne.s32.totalorder %s160, %s163
      %p169 = scmp.eq.s32.totalorder %s16, 0
      %p170 = por %p168, %p169
      %p171 = scmp.ne.s32.totalorder %s160, %s163
      %p172 = scmp.eq.s32.totalorder %s21, 7
      %p173 = por %p171, %p172
      %p174 = scmp.ne.s32.totalorder %s163, %s164
      %p175 = scmp.eq.s32.totalorder %s21, 0
      %p176 = por %p174, %p175
      %p177 = scmp.ne.s32.totalorder %s163, %s164
      %p178 = scmp.eq.s32.totalorder %s22, 7
      %p179 = por %p177, %p178
      %p181 = scmp.ne.s32.totalorder %s164, %s180
      %p182 = scmp.eq.s32.totalorder %s22, 0
      %p183 = por %p181, %p182
      %s184 = ssub.s32 %s25, %s41
      %p185 = scmp.eq.s32.totalorder %s184, 0
      %s187 = sadd.s32 %s186, 1
      %s188 = scalar_select %p185, %s186, %s187
      %p191 = pneg %p185
      %p192 = scmp.eq.s32.totalorder %s16, 7
      %p193 = por %p191, %p192
      %p194 = scmp.ne.s32.totalorder %s186, %s189
      %p195 = scmp.eq.s32.totalorder %s16, 0
      %p196 = por %p194, %p195
      %p197 = scmp.ne.s32.totalorder %s186, %s189
      %p198 = scmp.eq.s32.totalorder %s21, 7
      %p199 = por %p197, %p198
      %p200 = scmp.ne.s32.totalorder %s189, %s190
      %p201 = scmp.eq.s32.totalorder %s21, 0
      %p202 = por %p200, %p201
      %p203 = scmp.ne.s32.totalorder %s189, %s190
      %p204 = scmp.eq.s32.totalorder %s22, 7
      %p205 = por %p203, %p204
      %p207 = scmp.ne.s32.totalorder %s190, %s206
      %p208 = scmp.eq.s32.totalorder %s22, 0
      %p209 = por %p207, %p208
      %s211 = sadd.s32 %s210, 1
      %p214 = scmp.eq.s32.totalorder %s16, 7
      %p215 = scmp.ne.s32.totalorder %s210, %s212
      %p216 = scmp.eq.s32.totalorder %s16, 0
      %p217 = por %p215, %p216
      %p218 = scmp.ne.s32.totalorder %s210, %s212
      %p219 = scmp.eq.s32.totalorder %s21, 7
      %p220 = por %p218, %p219
      %p221 = scmp.ne.s32.totalorder %s212, %s213
      %p222 = scmp.eq.s32.totalorder %s21, 0
      %p223 = por %p221, %p222
      %p224 = scmp.ne.s32.totalorder %s212, %s213
      %p225 = scmp.eq.s32.totalorder %s22, 7
      %p226 = por %p224, %p225
      %p228 = scmp.ne.s32.totalorder %s213, %s227
      %p229 = scmp.eq.s32.totalorder %s22, 0
      %p230 = por %p228, %p229
      %s231 = ssub.s32 %s23, %s49
      %s232 = ssub.s32 %s24, %s45
      %s233 = sor.u32 %s231, %s232
      %p234 = scmp.eq.s32.totalorder %s233, 0
      %s236 = sadd.s32 %s235, 1
      %s237 = scalar_select %p234, %s235, %s236
      %p240 = pneg %p234
      %p241 = scmp.eq.s32.totalorder %s16, 7
      %p242 = por %p240, %p241
      %p243 = scmp.ne.s32.totalorder %s235, %s238
      %p244 = scmp.eq.s32.totalorder %s16, 0
      %p245 = por %p243, %p244
      %p246 = scmp.ne.s32.totalorder %s235, %s238
      %p247 = scmp.eq.s32.totalorder %s21, 7
      %p248 = por %p246, %p247
      %p249 = scmp.ne.s32.totalorder %s238, %s239
      %p250 = scmp.eq.s32.totalorder %s21, 0
      %p251 = por %p249, %p250
      %p252 = scmp.ne.s32.totalorder %s238, %s239
      %p253 = scmp.eq.s32.totalorder %s22, 7
      %p254 = por %p252, %p253
      %p256 = scmp.ne.s32.totalorder %s239, %s255
      %p257 = scmp.eq.s32.totalorder %s22, 0
      %p258 = por %p256, %p257
      %p259 = scmp.le.s32.totalorder 1, %s16
      %p260 = scmp.lt.s32.totalorder %s16, 9
      %p261 = pnand %p259, %p260
      %p262 = pneg %p261
      // Predicated region
      $region9: #{tpu_custom_call.1} parent=5 // pred_check
        _
      $region10: #{tpu_custom_call.1} parent=5 // pred_check_branch
        %264 = sbr.rel (%p261) target = $region12
      $region11: #{tpu_custom_call.1} parent=5 // pred_region
        %s265 = ssub.s32 %s16, 1
        // Predicated region
        $region13: #{tpu_custom_call.1} parent=11 // pred_check
          %p266 = pneg %p223
        $region14: #{tpu_custom_call.1} parent=11 // pred_check_branch
          %268 = sbr.rel (%p266) target = $region16
        $region15: #{tpu_custom_call.1} parent=11 // pred_region
          _
        $region16: #{tpu_custom_call.1} parent=11 // pred_fallthru
          _
      $region12: #{tpu_custom_call.1} parent=5 // pred_fallthru
        _
      %p269 = scmp.lt.s32.totalorder %s16, 8
      // Predicated region
      $region17: #{tpu_custom_call.1} parent=5 // pred_check
        %p270 = pneg %p269
      $region18: #{tpu_custom_call.1} parent=5 // pred_check_branch
        %272 = sbr.rel (%p270) target = $region20
      $region19: #{tpu_custom_call.1} parent=5 // pred_region
        // Predicated region
        $region21: #{tpu_custom_call.1} parent=19 // pred_check
          %p273 = pneg %p64
        $region22: #{tpu_custom_call.1} parent=19 // pred_check_branch
          %275 = sbr.rel (%p273) target = $region24
        $region23: #{tpu_custom_call.1} parent=19 // pred_region
          %p276 = scmp.lt.s32.totalorder %s23, 1
          %s277 = scalar_select %p276, %s23, 1
          %p278 = scmp.lt.s32.totalorder %s24, 0
          %s279 = scalar_select %p278, %s24, 0
          %s280 = sadd.s32 %s279, %s277
          %s281 = smul.addr %s280, 4
          %s282 = scalar_lea.vmem %s0, %s281
        $region24: #{tpu_custom_call.1} parent=19 // pred_fallthru
          _
        // Predicated region
        $region25: #{tpu_custom_call.1} parent=19 // pred_check
          %p283 = pneg %p92
        $region26: #{tpu_custom_call.1} parent=19 // pred_check_branch
          %285 = sbr.rel (%p283) target = $region28
        $region27: #{tpu_custom_call.1} parent=19 // pred_region
          %p286 = scmp.lt.s32.totalorder %s23, 1
          %s287 = scalar_select %p286, %s23, 1
          %p288 = scmp.lt.s32.totalorder %s26, 0
          %s289 = scalar_select %p288, %s26, 0
          %s290 = sadd.s32 %s289, %s287
          %s291 = smul.addr %s290, 4
          %s292 = scalar_lea.vmem %s1, %s291
        $region28: #{tpu_custom_call.1} parent=19 // pred_fallthru
          _
        // Predicated region
        $region29: #{tpu_custom_call.1} parent=19 // pred_check
          %p293 = pneg %p118
        $region30: #{tpu_custom_call.1} parent=19 // pred_check_branch
          %295 = sbr.rel (%p293) target = $region32
        $region31: #{tpu_custom_call.1} parent=19 // pred_region
          %p296 = scmp.lt.s32.totalorder %s25, 3
          %s297 = scalar_select %p296, %s25, 3
          %s298 = smul.addr %s297, 4
          %s299 = smul.addr %s298, 4
          %s300 = scalar_lea.vmem %s2, %s299
        $region32: #{tpu_custom_call.1} parent=19 // pred_fallthru
          _
        // Predicated region
        $region33: #{tpu_custom_call.1} parent=19 // pred_check
          %p301 = pneg %p144
        $region34: #{tpu_custom_call.1} parent=19 // pred_check_branch
          %303 = sbr.rel (%p301) target = $region36
        $region35: #{tpu_custom_call.1} parent=19 // pred_region
          %p304 = scmp.lt.s32.totalorder %s25, 3
          %s305 = scalar_select %p304, %s25, 3
          %s306 = smul.addr %s305, 4
          %s307 = smul.addr %s306, 4
          %s308 = scalar_lea.vmem %s3, %s307
        $region36: #{tpu_custom_call.1} parent=19 // pred_fallthru
          _
        // Predicated region
        $region37: #{tpu_custom_call.1} parent=19 // pred_check
          %p309 = pneg %p170
        $region38: #{tpu_custom_call.1} parent=19 // pred_check_branch
          %311 = sbr.rel (%p309) target = $region40
        $region39: #{tpu_custom_call.1} parent=19 // pred_region
          %p312 = scmp.lt.s32.totalorder %s25, 3
          %s313 = scalar_select %p312, %s25, 3
          %s314 = smul.addr %s313, 4
          %s315 = smul.addr %s314, 4
          %s316 = scalar_lea.vmem %s4, %s315
        $region40: #{tpu_custom_call.1} parent=19 // pred_fallthru
          _
        // Predicated region
        $region41: #{tpu_custom_call.1} parent=19 // pred_check
          %p317 = pneg %p196
        $region42: #{tpu_custom_call.1} parent=19 // pred_check_branch
          %319 = sbr.rel (%p317) target = $region44
        $region43: #{tpu_custom_call.1} parent=19 // pred_region
          %p320 = scmp.lt.s32.totalorder %s25, 3
          %s321 = scalar_select %p320, %s25, 3
          %s322 = smul.addr %s321, 4
          %s323 = scalar_lea.vmem %s5, %s322
        $region44: #{tpu_custom_call.1} parent=19 // pred_fallthru
          _
      $region20: #{tpu_custom_call.1} parent=5 // pred_fallthru
        _
      %p324 = scmp.le.s32.totalorder 1, %s16
      %p325 = scmp.lt.s32.totalorder %s16, 9
      %p326 = pnand %p324, %p325
      %p327 = pneg %p326
      // Predicated region
      $region45: #{tpu_custom_call.1} parent=5 // pred_check
        _
      $region46: #{tpu_custom_call.1} parent=5 // pred_check_branch
        %329 = sbr.rel (%p326) target = $region48
      $region47: #{tpu_custom_call.1} parent=5 // pred_region
        %s330 = ssub.s32 %s16, 1
        %p331 = scmp.lt.s32.totalorder %s27, 1
        %s332 = scalar_select %p331, %s27, 1
        %p333 = scmp.lt.s32.totalorder %s28, 0
        %s334 = scalar_select %p333, %s28, 0
        %s335 = sadd.s32 %s334, %s332
        %s336 = smul.addr %s335, 4
        %s337 = scalar_lea.vmem %s0, %s336
        %p338 = pneg %p70
        %p339 = pneg %p67
        %p340 = scmp.lt.s32.totalorder %s27, 1
        %s341 = scalar_select %p340, %s27, 1
        %p342 = scmp.lt.s32.totalorder %s30, 0
        %s343 = scalar_select %p342, %s30, 0
        %s344 = sadd.s32 %s343, %s341
        %s345 = smul.addr %s344, 4
        %s346 = scalar_lea.vmem %s1, %s345
        %p347 = pneg %p98
        %p348 = pneg %p95
        %p349 = scmp.lt.s32.totalorder %s29, 3
        %s350 = scalar_select %p349, %s29, 3
        %s351 = smul.addr %s350, 4
        %s352 = smul.addr %s351, 4
        %s353 = scalar_lea.vmem %s2, %s352
        %p354 = pneg %p124
        %p355 = pneg %p121
        %p356 = scmp.lt.s32.totalorder %s29, 3
        %s357 = scalar_select %p356, %s29, 3
        %s358 = smul.addr %s357, 4
        %s359 = smul.addr %s358, 4
        %s360 = scalar_lea.vmem %s3, %s359
        %p361 = pneg %p150
        %p362 = pneg %p147
        %p363 = scmp.lt.s32.totalorder %s29, 3
        %s364 = scalar_select %p363, %s29, 3
        %s365 = smul.addr %s364, 4
        %s366 = smul.addr %s365, 4
        %s367 = scalar_lea.vmem %s4, %s366
        %p368 = pneg %p176
        %p369 = pneg %p173
        %p370 = scmp.lt.s32.totalorder %s29, 3
        %s371 = scalar_select %p370, %s29, 3
        %s372 = smul.addr %s371, 4
        %s373 = scalar_lea.vmem %s5, %s372
        %p374 = pneg %p202
        %p375 = pneg %p199
        %p376 = pneg %p223
        %p377 = pneg %p220
        %p378 = pneg %p251
        %p379 = pneg %p248
        %s380 = sand.u32 %s238, 1
        %s381 = scalar_lea.sflag [#allocation7], %s380
        %s382 = sand.u32 %s238, 1
        %s383 = smul.addr %s382, 8
        %s384 = scalar_lea.vmem [#allocation6], %s383
        %p385 = scmp.lt.s32.totalorder %s27, 1
        %s386 = scalar_select %p385, %s27, 1
        %p387 = scmp.lt.s32.totalorder %s28, 0
        %s388 = scalar_select %p387, %s28, 0
        %s389 = sadd.s32 %s388, %s386
        %s390 = smul.addr %s389, 4
        %s391 = scalar_lea.vmem %s0, %s390
        %p392 = scmp.lt.s32.totalorder %s27, 1
        %s393 = scalar_select %p392, %s27, 1
        %p394 = scmp.lt.s32.totalorder %s30, 0
        %s395 = scalar_select %p394, %s30, 0
        %s396 = sadd.s32 %s395, %s393
        %s397 = smul.addr %s396, 4
        %s398 = scalar_lea.vmem %s1, %s397
        %p399 = scmp.lt.s32.totalorder %s29, 3
        %s400 = scalar_select %p399, %s29, 3
        %s401 = smul.addr %s400, 4
        %s402 = smul.addr %s401, 4
        %s403 = scalar_lea.vmem %s2, %s402
        %p404 = scmp.lt.s32.totalorder %s29, 3
        %s405 = scalar_select %p404, %s29, 3
        %s406 = smul.addr %s405, 4
        %s407 = smul.addr %s406, 4
        %s408 = scalar_lea.vmem %s3, %s407
        %p409 = scmp.lt.s32.totalorder %s29, 3
        %s410 = scalar_select %p409, %s29, 3
        %s411 = smul.addr %s410, 4
        %s412 = smul.addr %s411, 4
        %s413 = scalar_lea.vmem %s4, %s412
        %p414 = scmp.lt.s32.totalorder %s29, 3
        %s415 = scalar_select %p414, %s29, 3
        %s416 = smul.addr %s415, 4
        %s417 = scalar_lea.vmem %s5, %s416
        %p419 = scmp.eq.s32.totalorder %s29, 0
        %p420 = scmp.eq.s32.totalorder %s30, 0
        %p421 = pnand %p419, %p420
        %p422 = pneg %p421
        // Predicated region
        $region49: #{tpu_custom_call.1} parent=47 // pred_check
          _
        $region50: #{tpu_custom_call.1} parent=47 // pred_check_branch
          %424 = sbr.rel (%p421) target = $region52
        $region51: #{tpu_custom_call.1} parent=47 // pred_region
          %v425 = vld [vmem:[%s6] sm:$0x1]
          %v427 = vlaneseq
          %v428 = vshrl.u32 %v427, 7
          %v429 = vsub.s32 0, %v428
          %v430 = vrot.slane %v425, %v429
          %432 = vst [vmem:[%s384] sm:$0xff] %v430
        $region52: #{tpu_custom_call.1} parent=47 // pred_fallthru
          _
        // Predicated region
        $region53: #{tpu_custom_call.1} parent=47 // pred_check
          %p433 = pneg %p420
        $region54: #{tpu_custom_call.1} parent=47 // pred_check_branch
          %435 = sbr.rel (%p433) target = $region56
        $region55: #{tpu_custom_call.1} parent=47 // pred_region
          %v436 = vld [vmem:[%s391] sm:$0xf]
          %v437 = vld [vmem:[%s403] sm:$0xf]
          %v438 = vld [vmem:[%s403 + $0x4] sm:$0xf]
          %v439 = vld [vmem:[%s403 + $0x8] sm:$0xf]
          %v440 = vld [vmem:[%s403 + $0xc] sm:$0xf]
          %v445 = vunpack.c.l.b16 %v437
          %v446 = vunpack.c.l.b16 %v438
          %v447 = vunpack.c.l.b16 %v439
          %v448 = vunpack.c.l.b16 %v440
          %v449 = vpack.c.b16 %v446, %v445
          %v450 = vpack.c.b16 %v448, %v447
          %vm453 = vcmask 261120
          %v455 = vsel %vm453, %v436, 0
          %457 = vmatprep.subr.bf16.mxu0 0
          %458 = vmatpush1.bf16.msra.mxu0 %v449
          %459 = vmatprep.subr.bf16.mxu0 0
          %460 = vmatpush1.bf16.msra.mxu0 %v450
          %461 = vmatprep.subr.bf16.mxu0 0
          %462 = vmatpush1.bf16.msra.mxu0 0
          %463 = vmatprep.subr.bf16.mxu0 0
          %464 = vmatpush1.bf16.msra.mxu0 0
          %465 = vmatprep.subr.bf16.mxu0 0
          %466 = vmatpush1.bf16.msra.mxu0 0
          %467 = vmatprep.subr.bf16.mxu0 0
          %468 = vmatpush1.bf16.msra.mxu0 0
          %469 = vmatprep.subr.bf16.mxu0 0
          %470 = vmatpush1.bf16.msra.mxu0 0
          %471 = vmatprep.subr.bf16.mxu0 0
          %472 = vmatpush1.bf16.msra.mxu0 0
          %473 = vmatprep.subr.bf16.mxu0 0
          %474 = vmatpush1.bf16.msra.mxu0 0
          %475 = vmatprep.subr.bf16.mxu0 0
          %476 = vmatpush1.bf16.msra.mxu0 0
          %477 = vmatprep.subr.bf16.mxu0 0
          %478 = vmatpush1.bf16.msra.mxu0 0
          %479 = vmatprep.subr.bf16.mxu0 0
          %480 = vmatpush1.bf16.msra.mxu0 0
          %481 = vmatprep.subr.bf16.mxu0 0
          %482 = vmatpush1.bf16.msra.mxu0 0
          %483 = vmatprep.subr.bf16.mxu0 0
          %484 = vmatpush1.bf16.msra.mxu0 0
          %485 = vmatprep.subr.bf16.mxu0 0
          %486 = vmatpush1.bf16.msra.mxu0 0
          %487 = vmatprep.subr.bf16.mxu0 0
          %488 = vmatpush1.bf16.msra.mxu0 0
          %489 = vmatprep.mubr.bf16.mxu0 0
          %490 = vmatmul.mubr.bf16.gmra.mrb[0].mxu0 %v455
          %v491 = vpop.f32.mrb[0].mxu0
          %v492 = vadd.f32 0.0, %v491
          %v493 = vpop.f32.mrb[0].mxu0
          %v494 = vpop.f32.mrb[0].mxu0
          %v495 = vpop.f32.mrb[0].mxu0
          %496 = vdwg.mxu0
          %v497 = vpack.c.bf16 %v492, %v492
          %vm498 = vcmask 60416
          %499 = vst.msk [vmem:[#allocation2] sm:$0xf] %vm498, %v497
          %vm500 = vcmask 7168
          %501 = vst.msk [vmem:[#allocation3] sm:$0xff] %vm500, -1e+30
          %502 = vst.msk [vmem:[#allocation4] sm:$0xff] %vm500, 0.0
          %vm503 = vcmask 64512
          %504 = vst.msk [vmem:[#allocation5] sm:$0xff] %vm503, 0.0
        $region56: #{tpu_custom_call.1} parent=47 // pred_fallthru
          _
        %s505 = smul.u32 %s30, 8
        %s506 = smul.u32 %s28, 8
        %s507 = sadd.s32 %s506, 7
        %p508 = scmp.le.s32.totalorder %s505, %s507
        // Predicated region
        $region57: #{tpu_custom_call.1} parent=47 // pred_check
          %p509 = pneg %p508
        $region58: #{tpu_custom_call.1} parent=47 // pred_check_branch
          %511 = sbr.rel (%p509) target = $region60
        $region59: #{tpu_custom_call.1} parent=47 // pred_region
          %v512 = vld [vmem:[%s398] sm:$0xf]
          %v513 = vld [vmem:[%s408] sm:$0xf]
          %v514 = vld [vmem:[%s408 + $0x4] sm:$0xf]
          %v515 = vld [vmem:[%s408 + $0x8] sm:$0xf]
          %v516 = vld [vmem:[%s408 + $0xc] sm:$0xf]
          %v521 = vunpack.c.l.b16 %v513
          %v522 = vunpack.c.l.b16 %v514
          %v523 = vunpack.c.l.b16 %v515
          %v524 = vunpack.c.l.b16 %v516
          %v525 = vpack.c.b16 %v522, %v521
          %v526 = vpack.c.b16 %v524, %v523
          %vm529 = vcmask 261120
          %v531 = vsel %vm529, %v512, 0
          %533 = vmatprep.subr.bf16.mxu0 0
          %534 = vmatpush1.bf16.msra.mxu0 %v525
          %535 = vmatprep.subr.bf16.mxu0 0
          %536 = vmatpush1.bf16.msra.mxu0 %v526
          %537 = vmatprep.subr.bf16.mxu0 0
          %538 = vmatpush1.bf16.msra.mxu0 0
          %539 = vmatprep.subr.bf16.mxu0 0
          %540 = vmatpush1.bf16.msra.mxu0 0
          %541 = vmatprep.subr.bf16.mxu0 0
          %542 = vmatpush1.bf16.msra.mxu0 0
          %543 = vmatprep.subr.bf16.mxu0 0
          %544 = vmatpush1.bf16.msra.mxu0 0
          %545 = vmatprep.subr.bf16.mxu0 0
          %546 = vmatpush1.bf16.msra.mxu0 0
          %547 = vmatprep.subr.bf16.mxu0 0
          %548 = vmatpush1.bf16.msra.mxu0 0
          %549 = vmatprep.subr.bf16.mxu0 0
          %550 = vmatpush1.bf16.msra.mxu0 0
          %551 = vmatprep.subr.bf16.mxu0 0
          %552 = vmatpush1.bf16.msra.mxu0 0
          %553 = vmatprep.subr.bf16.mxu0 0
          %554 = vmatpush1.bf16.msra.mxu0 0
          %555 = vmatprep.subr.bf16.mxu0 0
          %556 = vmatpush1.bf16.msra.mxu0 0
          %557 = vmatprep.subr.bf16.mxu0 0
          %558 = vmatpush1.bf16.msra.mxu0 0
          %559 = vmatprep.subr.bf16.mxu0 0
          %560 = vmatpush1.bf16.msra.mxu0 0
          %561 = vmatprep.subr.bf16.mxu0 0
          %562 = vmatpush1.bf16.msra.mxu0 0
          %563 = vmatprep.subr.bf16.mxu0 0
          %564 = vmatpush1.bf16.msra.mxu0 0
          %565 = vmatprep.mubr.bf16.mxu0 0
          %566 = vmatmul.mubr.bf16.gmra.mrb[0].mxu0 %v531
          %v567 = vpop.f32.mrb[0].mxu0
          %v568 = vadd.f32 0.0, %v567
          %v569 = vpop.f32.mrb[0].mxu0
          %v570 = vpop.f32.mrb[0].mxu0
          %v571 = vpop.f32.mrb[0].mxu0
          %572 = vdwg.mxu0
          %v573 = vld [vmem:[%s413] sm:$0xf]
          %v574 = vld [vmem:[%s413 + $0x4] sm:$0xf]
          %v575 = vld [vmem:[%s413 + $0x8] sm:$0xf]
          %v576 = vld [vmem:[%s413 + $0xc] sm:$0xf]
          %v581 = vunpack.c.l.b16 %v573
          %v582 = vunpack.c.l.b16 %v574
          %v583 = vunpack.c.l.b16 %v575
          %v584 = vunpack.c.l.b16 %v576
          %v585 = vpack.c.b16 %v582, %v581
          %v586 = vpack.c.b16 %v584, %v583
          %589 = vmatprep.subr.bf16.mxu0 0
          %590 = vmatpush1.bf16.msra.mxu0 %v585
          %591 = vmatprep.subr.bf16.mxu0 0
          %592 = vmatpush1.bf16.msra.mxu0 %v586
          %593 = vmatprep.subr.bf16.mxu0 0
          %594 = vmatpush1.bf16.msra.mxu0 0
          %595 = vmatprep.subr.bf16.mxu0 0
          %596 = vmatpush1.bf16.msra.mxu0 0
          %597 = vmatprep.subr.bf16.mxu0 0
          %598 = vmatpush1.bf16.msra.mxu0 0
          %599 = vmatprep.subr.bf16.mxu0 0
          %600 = vmatpush1.bf16.msra.mxu0 0
          %601 = vmatprep.subr.bf16.mxu0 0
          %602 = vmatpush1.bf16.msra.mxu0 0
          %603 = vmatprep.subr.bf16.mxu0 0
          %604 = vmatpush1.bf16.msra.mxu0 0
          %605 = vmatprep.subr.bf16.mxu0 0
          %606 = vmatpush1.bf16.msra.mxu0 0
          %607 = vmatprep.subr.bf16.mxu0 0
          %608 = vmatpush1.bf16.msra.mxu0 0
          %609 = vmatprep.subr.bf16.mxu0 0
          %610 = vmatpush1.bf16.msra.mxu0 0
          %611 = vmatprep.subr.bf16.mxu0 0
          %612 = vmatpush1.bf16.msra.mxu0 0
          %613 = vmatprep.subr.bf16.mxu0 0
          %614 = vmatpush1.bf16.msra.mxu0 0
          %615 = vmatprep.subr.bf16.mxu0 0
          %616 = vmatpush1.bf16.msra.mxu0 0
          %617 = vmatprep.subr.bf16.mxu0 0
          %618 = vmatpush1.bf16.msra.mxu0 0
          %619 = vmatprep.subr.bf16.mxu0 0
          %620 = vmatpush1.bf16.msra.mxu0 0
          %621 = vmatprep.mubr.bf16.mxu0 0
          %622 = vmatmul.mubr.bf16.gmra.mrb[0].mxu0 %v531
          %v623 = vpop.f32.mrb[0].mxu0
          %v624 = vadd.f32 0.0, %v623
          %v625 = vpop.f32.mrb[0].mxu0
          %v626 = vpop.f32.mrb[0].mxu0
          %v627 = vpop.f32.mrb[0].mxu0
          %628 = vdwg.mxu0
          %v629 = vld [vmem:[#allocation2] sm:$0xf]
          %v630 = vpack.c.bf16 %v568, %v568
          %vm631 = vcmask 64512
          %v633 = vsel %vm631, %v629, 0
          %v636 = vsel %vm631, %v630, 0
          %638 = vmatprep.subr.bf16.mxu0 0
          %639 = vmatpush1.bf16.xpose.msra.mxu0 %v636
          %640 = vmatprep.subr.bf16.mxu0 0
          %641 = vmatpush1.bf16.xpose.msra.mxu0 0
          %642 = vmatprep.subr.bf16.mxu0 0
          %643 = vmatpush1.bf16.xpose.msra.mxu0 0
          %644 = vmatprep.subr.bf16.mxu0 0
          %645 = vmatpush1.bf16.xpose.msra.mxu0 0
          %646 = vmatprep.subr.bf16.mxu0 0
          %647 = vmatpush1.bf16.xpose.msra.mxu0 0
          %648 = vmatprep.subr.bf16.mxu0 0
          %649 = vmatpush1.bf16.xpose.msra.mxu0 0
          %650 = vmatprep.subr.bf16.mxu0 0
          %651 = vmatpush1.bf16.xpose.msra.mxu0 0
          %652 = vmatprep.subr.bf16.mxu0 0
          %653 = vmatpush1.bf16.xpose.msra.mxu0 0
          %654 = vmatprep.subr.bf16.mxu0 0
          %655 = vmatpush1.bf16.xpose.msra.mxu0 0
          %656 = vmatprep.subr.bf16.mxu0 0
          %657 = vmatpush1.bf16.xpose.msra.mxu0 0
          %658 = vmatprep.subr.bf16.mxu0 0
          %659 = vmatpush1.bf16.xpose.msra.mxu0 0
          %660 = vmatprep.subr.bf16.mxu0 0
          %661 = vmatpush1.bf16.xpose.msra.mxu0 0
          %662 = vmatprep.subr.bf16.mxu0 0
          %663 = vmatpush1.bf16.xpose.msra.mxu0 0
          %664 = vmatprep.subr.bf16.mxu0 0
          %665 = vmatpush1.bf16.xpose.msra.mxu0 0
          %666 = vmatprep.subr.bf16.mxu0 0
          %667 = vmatpush1.bf16.xpose.msra.mxu0 0
          %668 = vmatprep.subr.bf16.mxu0 0
          %669 = vmatpush1.bf16.xpose.msra.mxu0 0
          %670 = vmatprep.mubr.bf16.mxu0 0
          %671 = vmatmul.mubr.bf16.gmra.mrb[0].mxu0 %v633
          %v672 = vpop.f32.mrb[0].mxu0
          %v673 = vadd.f32 0.0, %v672
          %v674 = vpop.f32.mrb[0].mxu0
          %v675 = vpop.f32.mrb[0].mxu0
          %v676 = vpop.f32.mrb[0].mxu0
          %677 = vdwg.mxu0
          %v678 = vlaneseq
          %v679 = vshrl.u32 %v678, 7
          %v680 = vstv %s506
          %v681 = vadd.s32 %v680, %v679
          %v682 = vlaneseq
          %v683 = vand.u32 %v682, 127
          %v684 = vstv %s505
          %v685 = vadd.s32 %v684, %v683
          %vm686 = vcmp.le.s32.totalorder %v685, %v681
          %v687 = vsel %vm686, %v673, -1e+30
          %v688 = vld [vmem:[#allocation3] sm:$0xff]
          %v689 = vsel %vm631, %v687, -inf
          %690 = vmax.xlane.f32.xlu0 %v689
          %v691 = vpop.xlane.xlu0 %690
          %v692 = vmax.f32 %v688, %v691
          %v693 = vsub.f32 %v688, %v692
          %v694 = vmul.f32 %v693, 1.442695
          %v695 = vpow.pop %v694
          %697 = vset.pattern.permute.xlu0 0
          %698 = vperm.xlu0 %697, %v692
          %v699 = vpop.permute.xlu0 %698
          %v701 = vsub.f32 %v687, %v699
          %v702 = vmul.f32 %v701, 1.442695
          %v703 = vpow.pop %v702
          %v704 = vld [vmem:[#allocation4] sm:$0xff]
          %v705 = vmul.f32 %v695, %v704
          %v706 = vsel %vm631, %v703, 0.0
          %707 = vadd.xlane.f32.xlu0 %v706
          %v708 = vpop.xlane.xlu0 %707
          %v709 = vadd.f32 %v705, %v708
          %vm710 = vcmask 7168
          %711 = vst.msk [vmem:[#allocation4] sm:$0xff] %vm710, %v709
          %v712 = vld [vmem:[#allocation5] sm:$0xff]
          %714 = vset.pattern.permute.xlu0 0
          %715 = vperm.xlu0 %714, %v695
          %v716 = vpop.permute.xlu0 %715
          %v718 = vmul.f32 %v716, %v712
          %v719 = vpack.c.bf16 %v703, %v703
          %v720 = vpack.c.bf16 %v624, %v624
          %v722 = vsel %vm631, %v719, 0
          %vm724 = vcmask 1043456
          %v726 = vsel %vm724, %v720, 0
          %728 = vmatprep.subr.bf16.mxu0 0
          %729 = vmatpush1.bf16.msra.mxu0 %v726
          %730 = vmatprep.subr.bf16.mxu0 0
          %731 = vmatpush1.bf16.msra.mxu0 0
          %732 = vmatprep.subr.bf16.mxu0 0
          %733 = vmatpush1.bf16.msra.mxu0 0
          %734 = vmatprep.subr.bf16.mxu0 0
          %735 = vmatpush1.bf16.msra.mxu0 0
          %736 = vmatprep.subr.bf16.mxu0 0
          %737 = vmatpush1.bf16.msra.mxu0 0
          %738 = vmatprep.subr.bf16.mxu0 0
          %739 = vmatpush1.bf16.msra.mxu0 0
          %740 = vmatprep.subr.bf16.mxu0 0
          %741 = vmatpush1.bf16.msra.mxu0 0
          %742 = vmatprep.subr.bf16.mxu0 0
          %743 = vmatpush1.bf16.msra.mxu0 0
          %744 = vmatprep.subr.bf16.mxu0 0
          %745 = vmatpush1.bf16.msra.mxu0 0
          %746 = vmatprep.subr.bf16.mxu0 0
          %747 = vmatpush1.bf16.msra.mxu0 0
          %748 = vmatprep.subr.bf16.mxu0 0
          %749 = vmatpush1.bf16.msra.mxu0 0
          %750 = vmatprep.subr.bf16.mxu0 0
          %751 = vmatpush1.bf16.msra.mxu0 0
          %752 = vmatprep.subr.bf16.mxu0 0
          %753 = vmatpush1.bf16.msra.mxu0 0
          %754 = vmatprep.subr.bf16.mxu0 0
          %755 = vmatpush1.bf16.msra.mxu0 0
          %756 = vmatprep.subr.bf16.mxu0 0
          %757 = vmatpush1.bf16.msra.mxu0 0
          %758 = vmatprep.subr.bf16.mxu0 0
          %759 = vmatpush1.bf16.msra.mxu0 0
          %760 = vmatprep.mubr.bf16.mxu0 0
          %761 = vmatmul.mubr.bf16.gmra.mrb[0].mxu0 %v722
          %v762 = vpop.f32.mrb[0].mxu0
          %v763 = vadd.f32 0.0, %v762
          %v764 = vpop.f32.mrb[0].mxu0
          %v765 = vpop.f32.mrb[0].mxu0
          %v766 = vpop.f32.mrb[0].mxu0
          %767 = vdwg.mxu0
          %v768 = vadd.f32 %v718, %v763
          %769 = vst.msk [vmem:[#allocation5] sm:$0xff] %vm631, %v768
          %770 = vst.msk [vmem:[#allocation3] sm:$0xff] %vm710, %v692
        $region60: #{tpu_custom_call.1} parent=47 // pred_fallthru
          _
        // Predicated region
        $region61: #{tpu_custom_call.1} parent=47 // pred_check
          %p771 = pneg %p420
        $region62: #{tpu_custom_call.1} parent=47 // pred_check_branch
          %773 = sbr.rel (%p771) target = $region64
        $region63: #{tpu_custom_call.1} parent=47 // pred_region
          %v774 = vld [vmem:[#allocation5] sm:$0xff]
          %v775 = vld [vmem:[#allocation4] sm:$0xff]
          %v776 = vrcp.pop %v775
          %778 = vset.pattern.permute.xlu0 0
          %779 = vperm.xlu0 %778, %v776
          %v780 = vpop.permute.xlu0 %779
          %v782 = vmul.f32 %v774, %v780
          %v783 = vld [vmem:[%s384] sm:$0xff]
          %v784 = vpack.c.bf16 %v782, %v782
          %v785 = vld [vmem:[%s417] sm:$0xf]
          %vm786 = vcmask 64512
          %v788 = vsel %vm786, %v784, 0
          %vm790 = vcmask 1043456
          %v792 = vsel %vm790, %v785, 0
          %794 = vmatprep.subr.bf16.mxu0 0
          %795 = vmatpush1.bf16.msra.mxu0 %v792
          %796 = vmatprep.subr.bf16.mxu0 0
          %797 = vmatpush1.bf16.msra.mxu0 0
          %798 = vmatprep.subr.bf16.mxu0 0
          %799 = vmatpush1.bf16.msra.mxu0 0
          %800 = vmatprep.subr.bf16.mxu0 0
          %801 = vmatpush1.bf16.msra.mxu0 0
          %802 = vmatprep.subr.bf16.mxu0 0
          %803 = vmatpush1.bf16.msra.mxu0 0
          %804 = vmatprep.subr.bf16.mxu0 0
          %805 = vmatpush1.bf16.msra.mxu0 0
          %806 = vmatprep.subr.bf16.mxu0 0
          %807 = vmatpush1.bf16.msra.mxu0 0
          %808 = vmatprep.subr.bf16.mxu0 0
          %809 = vmatpush1.bf16.msra.mxu0 0
          %810 = vmatprep.subr.bf16.mxu0 0
          %811 = vmatpush1.bf16.msra.mxu0 0
          %812 = vmatprep.subr.bf16.mxu0 0
          %813 = vmatpush1.bf16.msra.mxu0 0
          %814 = vmatprep.subr.bf16.mxu0 0
          %815 = vmatpush1.bf16.msra.mxu0 0
          %816 = vmatprep.subr.bf16.mxu0 0
          %817 = vmatpush1.bf16.msra.mxu0 0
          %818 = vmatprep.subr.bf16.mxu0 0
          %819 = vmatpush1.bf16.msra.mxu0 0
          %820 = vmatprep.subr.bf16.mxu0 0
          %821 = vmatpush1.bf16.msra.mxu0 0
          %822 = vmatprep.subr.bf16.mxu0 0
          %823 = vmatpush1.bf16.msra.mxu0 0
          %824 = vmatprep.subr.bf16.mxu0 0
          %825 = vmatpush1.bf16.msra.mxu0 0
          %826 = vmatprep.mubr.bf16.mxu0 0
          %827 = vmatmul.mubr.bf16.gmra.mrb[0].mxu0 %v788
          %v828 = vpop.f32.mrb[0].mxu0
          %v829 = vadd.f32 0.0, %v828
          %v830 = vpop.f32.mrb[0].mxu0
          %v831 = vpop.f32.mrb[0].mxu0
          %v832 = vpop.f32.mrb[0].mxu0
          %833 = vdwg.mxu0
          %v834 = vadd.f32 %v783, %v829
          %835 = vst [vmem:[%s384] sm:$0xff] %v834
        $region64: #{tpu_custom_call.1} parent=47 // pred_fallthru
          _
        %s836 = sand.u32 %s238, 1
        %s837 = scalar_lea.sflag [#allocation7], %s836
        %s838 = sand.u32 %s238, 1
        %s839 = smul.addr %s838, 8
        %s840 = scalar_lea.vmem [#allocation6], %s839
        // Predicated region
        $region65: #{tpu_custom_call.1} parent=47 // pred_check
          %p841 = pneg %p248
        $region66: #{tpu_custom_call.1} parent=47 // pred_check_branch
          %843 = sbr.rel (%p841) target = $region68
        $region67: #{tpu_custom_call.1} parent=47 // pred_region
          %s845 = ssub.s32 128, 128
          %846 = vsyncadd %s837, %s845
          %s847 = sadd.s32 %s28, %s27
          %s848 = smul.addr %s847, 128
          %s849 = scalar_lea.hbm %s7, %s848
          %s851 = sshll.u32 %s840, 4
          %s852 = int_to_ptr.vmem [resolvable:$true] %s851
          %854 = dma.vmem_to_hbm [thread:$0]  %s852, 128, %s849, %s837
        $region68: #{tpu_custom_call.1} parent=47 // pred_fallthru
          _
      $region48: #{tpu_custom_call.1} parent=5 // pred_fallthru
        _
      %p855 = scmp.le.s32.totalorder 2, %s16
      // Predicated region
      $region69: #{tpu_custom_call.1} parent=5 // pred_check
        %p856 = pneg %p855
      $region70: #{tpu_custom_call.1} parent=5 // pred_check_branch
        %858 = sbr.rel (%p856) target = $region72
      $region71: #{tpu_custom_call.1} parent=5 // pred_region
        %s859 = ssub.s32 %s16, 2
        // Predicated region
        $region73: #{tpu_custom_call.1} parent=71 // pred_check
          %p860 = pneg %p254
        $region74: #{tpu_custom_call.1} parent=71 // pred_check_branch
          %862 = sbr.rel (%p860) target = $region76
        $region75: #{tpu_custom_call.1} parent=71 // pred_region
          %s863 = sand.u32 %s239, 1
          %s864 = scalar_lea.sflag [#allocation7], %s863
          %s865 = sand.u32 %s239, 1
          %s866 = smul.addr %s865, 8
          %s867 = scalar_lea.vmem [#allocation6], %s866
          %868 = dma.done %s864, 128
        $region76: #{tpu_custom_call.1} parent=71 // pred_fallthru
          _
      $region72: #{tpu_custom_call.1} parent=5 // pred_fallthru
        _
    $region6: #{tpu_custom_call.1} parent=1 // loop_footer
      %s20 = sadd.s32 1, %s16
    $region7: #{tpu_custom_call.1} parent=1 // loop_footer_branch
      %15 = sbr.rel target = $region3
    $region8: #{tpu_custom_call.1} parent=1 // loop_exit
      _
    %869 = vsyncpa [#allocation7], 1
    %s870 = scalar_lea.sflag [#allocation7], 1
    %871 = vsyncpa %s870, 1

</llo_original>
